<compile_context>
chip_gen: v5e
topology: v5e:2x2
jax: 0.10.0
libtpu: 0.0.40
codegen_flags: <defaults>
</compile_context>

<pallas_src>
import math
import functools

import jax
import jax.numpy as jnp
from jax.experimental import pallas as pl
from jax.experimental.pallas import tpu as pltpu

MIN_NORM = 1e-15          # geoopt clamp_min on norms
ARTANH_EPS = 1e-7         # geoopt artanh domain clamp
BALL_EPS_F32 = 4e-3       # geoopt projx boundary eps for float32


def _beta(a, b):
    """Euler beta function B(a, b)."""
    return math.exp(math.lgamma(a) + math.lgamma(b) - math.lgamma(a + b))


def _round_up(a, m):
    return -(-a // m) * m


def poincare_glu_kernel(gate_scale_ref, x_ref, o_ref, *, ratio, sqrt_c, max_norm):
    """One row-tile of PoincareGLU: logmap0 -> scaled gate -> expmap0 -> projx."""
    x = x_ref[...].astype(jnp.float32)                     # (T, C)
    C = x.shape[-1]
    half = C // 2

    # ---- logmap0 scale as a per-row column (beta ratio folded in) ----
    x_norm = jnp.sqrt(jnp.sum(x * x, axis=-1, keepdims=True))
    x_norm = jnp.maximum(x_norm, MIN_NORM)
    z = jnp.minimum(sqrt_c * x_norm, 1.0 - ARTANH_EPS)     # artanh domain clamp
    artanh = 0.5 * jnp.log((1.0 + z) / (1.0 - z))
    inv_xn = pl.reciprocal(sqrt_c * x_norm, approx=True)   # EUP, per row only
    log_col = artanh * ratio * inv_xn                      # (T, 1)

    # ---- gated linear unit in tangent space ----
    gate_scale = gate_scale_ref[0]                         # sqrt(C) * exp(scale)
    xa = x[:, :half] * log_col                             # (T, C//2)
    gate = jax.nn.sigmoid(x[:, half:] * (log_col * gate_scale))
    v = xa * gate                                          # (T, C//2)

    # ---- expmap0 + projx fused into one per-row column factor ----
    # y = v * tanh(sqrt_c*||v||)/(sqrt_c*||v||); ||y|| = tanh(sqrt_c*||v||)/sqrt_c.
    # Clipping to max_norm therefore collapses to min(tanh/sqrt_c, max_norm)/||v||.
    v_norm = jnp.maximum(jnp.sqrt(jnp.sum(v * v, axis=-1, keepdims=True)), MIN_NORM)
    tanh_v = jnp.tanh(sqrt_c * v_norm)
    factor = jnp.minimum(tanh_v * (1.0 / sqrt_c), max_norm) * pl.reciprocal(
        v_norm, approx=True
    )                                                      # (T, 1)

    o_ref[...] = (v * factor).astype(o_ref.dtype)


def _pick_tile_rows(rows, C, itemsize, target=512, pipeline_budget_bytes=8 << 20):
    """Largest sublane-aligned row tile that fits the pipeline VMEM budget,
    without over-padding small inputs and keeping >= 2 grid steps (megacore)."""
    sub = max(8, 32 // max(itemsize, 1))        # 8 for f32, 16 for bf16, 32 for int8
    per_row = (C + C // 2) * itemsize * 2       # double-buffered input + output block
    cap = max(sub, (pipeline_budget_bytes // per_row) // sub * sub)
    t = min(_round_up(target, sub), cap)
    half_rows = _round_up(max(sub, _round_up(rows, sub) // 2), sub)
    return max(sub, min(t, half_rows))


def poincare_glu(x, scale, c=1.0, tile_rows=None):
    """x: (..., C) points on the Poincare ball. Returns (..., C // 2)."""
    *lead, C = x.shape
    assert C % 2 == 0, "channels must be even for chunk(2)"
    rows = int(math.prod(lead)) if lead else 1
    x2d = x.reshape(rows, C)

    itemsize = jnp.dtype(x.dtype).itemsize
    if tile_rows is None:
        tile_rows = _pick_tile_rows(rows, C, itemsize)
    padded_rows = _round_up(rows, tile_rows)
    if padded_rows != rows:
        x2d = jnp.pad(x2d, ((0, padded_rows - rows), (0, 0)))

    beta_n = _beta(C / 2.0, 0.5)
    beta_ni = _beta(C / 4.0, 0.5)
    ratio = beta_ni / beta_n
    sqrt_c = float(c) ** 0.5
    max_norm = (1.0 - BALL_EPS_F32) / sqrt_c

    # sqrt(C) * exp(scale) as a tiny SMEM scalar (parameter glue, not hot path).
    gate_scale = (jnp.exp(scale.astype(jnp.float32)) * (C ** 0.5)).reshape(1)

    kernel = functools.partial(
        poincare_glu_kernel, ratio=ratio, sqrt_c=sqrt_c, max_norm=max_norm
    )

    # NOTE: output last dim is C//2; at C >= 256 it is a lane-dense multiple of
    # 128 (unmasked vst).  Smaller C still works (full-dim block) but stores
    # become masked -- repack in the caller if that case ever matters.
    out2d = pl.pallas_call(
        kernel,
        out_shape=jax.ShapeDtypeStruct((padded_rows, C // 2), x.dtype),
        grid=(padded_rows // tile_rows,),
        in_specs=[
            pl.BlockSpec(memory_space=pltpu.MemorySpace.SMEM),       # gate_scale (1,)
            pl.BlockSpec((tile_rows, C), lambda i: (i, 0)),          # x tile
        ],
        out_specs=pl.BlockSpec((tile_rows, C // 2), lambda i: (i, 0)),
        compiler_params=pltpu.CompilerParams(
            dimension_semantics=("parallel",),
            vmem_limit_bytes=32 * 1024 * 1024,   # above v5e's 16 MiB scoped default
        ),
    )(gate_scale, x2d)

    if padded_rows != rows:
        out2d = out2d[:rows]
    return out2d.reshape(*lead, C // 2)


def poincare_glu_reference(x, scale, c=1.0):
    """Pure-JAX reference mirroring the PyTorch module + geoopt math."""
    C = x.shape[-1]
    sqrt_c = float(c) ** 0.5
    ratio = _beta(C / 4.0, 0.5) / _beta(C / 2.0, 0.5)

    x_norm = jnp.maximum(jnp.linalg.norm(x, axis=-1, keepdims=True), MIN_NORM)
    z = jnp.minimum(sqrt_c * x_norm, 1.0 - ARTANH_EPS)
    u = x * (jnp.arctanh(z) / (sqrt_c * x_norm)) * ratio
    xa, xb = jnp.split(u, 2, axis=-1)
    v = xa * jax.nn.sigmoid(xb * (C ** 0.5) * jnp.exp(scale))
    v_norm = jnp.maximum(jnp.linalg.norm(v, axis=-1, keepdims=True), MIN_NORM)
    y = jnp.tanh(sqrt_c * v_norm) * v / (sqrt_c * v_norm)
    y_norm = jnp.maximum(jnp.linalg.norm(y, axis=-1, keepdims=True), MIN_NORM)
    max_norm = (1.0 - BALL_EPS_F32) / sqrt_c
    return jnp.where(y_norm > max_norm, y / y_norm * max_norm, y)


if __name__ == "__main__":
    key = jax.random.PRNGKey(0)
    scale = jnp.zeros((1,), dtype=jnp.float32)   # nn.Parameter(torch.zeros(1))

    # Case 1: small deterministic input, multiple grid steps.
    batch, seq, channels = 2, 8, 256
    x = 0.02 * jax.random.normal(key, (batch, seq, channels), dtype=jnp.float32)
    out = jax.block_until_ready(poincare_glu(x, scale))
    ref = poincare_glu_reference(x, scale)
    assert out.shape == (batch, seq, channels // 2)
    assert jnp.allclose(out, ref, rtol=5e-3, atol=1e-5), "mismatch vs reference (case 1)"

    # Case 2: row count not a multiple of the tile (exercises padding path).
    k2 = jax.random.PRNGKey(1)
    x2 = 0.02 * jax.random.normal(k2, (3, 5, channels), dtype=jnp.float32)
    out2 = jax.block_until_ready(poincare_glu(x2, scale))
    ref2 = poincare_glu_reference(x2, scale)
    assert out2.shape == (3, 5, channels // 2)
    assert jnp.allclose(out2, ref2, rtol=5e-3, atol=1e-5), "mismatch vs reference (case 2)"

    # Case 3: points near the ball boundary (exercises the projx clip branch).
    k3 = jax.random.PRNGKey(2)
    x3 = jax.random.normal(k3, (4, 7, channels), dtype=jnp.float32)
    x3 = x3 / jnp.linalg.norm(x3, axis=-1, keepdims=True) * 0.995
    out3 = jax.block_until_ready(poincare_glu(x3, scale))
    ref3 = poincare_glu_reference(x3, scale)
    assert jnp.allclose(out3, ref3, rtol=5e-3, atol=1e-5), "mismatch vs reference (case 3)"

    print("KERNEL_OK")
</pallas_src>

<mosaic_0001>
module attributes {stable_mosaic.version = 11 : i64} {
  func.func @poincare_glu_kernel(%arg0: i32, %arg1: memref<1xf32, #tpu.memory_space<smem>>, %arg2: memref<8x256xf32, #tpu.memory_space<vmem>>, %arg3: memref<8x128xf32, #tpu.memory_space<vmem>>) attributes {dimension_semantics = [#tpu.dimension_semantics<parallel>], iteration_bounds = array<i64: 2>, scalar_prefetch = 0 : i64, scratch_operands = 0 : i64, tpu.core_type = #tpu.core_type<tc>, window_params = [{transform_indices = @transform_0, window_bounds = array<i64: 1>}, {transform_indices = @transform_1, window_bounds = array<i64: 8, 256>}, {transform_indices = @transform_2, window_bounds = array<i64: 8, 128>}]} {
    %c0 = arith.constant 0 : index
    %c0_0 = arith.constant 0 : index
    %0 = vector.load %arg2[%c0, %c0_0] : memref<8x256xf32, #tpu.memory_space<vmem>>, vector<8x256xf32>
    %1 = arith.mulf %0, %0 : vector<8x256xf32>
    %cst = arith.constant dense<0.000000e+00> : vector<8xf32>
    %2 = vector.multi_reduction <add>, %1, %cst [1] : vector<8x256xf32> to vector<8xf32>
    %3 = vector.shape_cast %2 : vector<8xf32> to vector<8x1xf32>
    %4 = math.sqrt %3 : vector<8x1xf32>
    %cst_1 = arith.constant 1.000000e-15 : f32
    %5 = vector.broadcast %cst_1 : f32 to vector<8x1xf32>
    %6 = arith.maximumf %4, %5 : vector<8x1xf32>
    %cst_2 = arith.constant 1.000000e+00 : f32
    %7 = vector.broadcast %cst_2 : f32 to vector<8x1xf32>
    %8 = arith.mulf %7, %6 : vector<8x1xf32>
    %cst_3 = arith.constant 0.99999988 : f32
    %9 = vector.broadcast %cst_3 : f32 to vector<8x1xf32>
    %10 = arith.minimumf %8, %9 : vector<8x1xf32>
    %cst_4 = arith.constant 1.000000e+00 : f32
    %11 = vector.broadcast %cst_4 : f32 to vector<8x1xf32>
    %12 = arith.addf %11, %10 : vector<8x1xf32>
    %cst_5 = arith.constant 1.000000e+00 : f32
    %13 = vector.broadcast %cst_5 : f32 to vector<8x1xf32>
    %14 = arith.subf %13, %10 : vector<8x1xf32>
    %15 = arith.divf %12, %14 : vector<8x1xf32>
    %16 = math.log %15 : vector<8x1xf32>
    %cst_6 = arith.constant 5.000000e-01 : f32
    %17 = vector.broadcast %cst_6 : f32 to vector<8x1xf32>
    %18 = arith.mulf %17, %16 : vector<8x1xf32>
    %cst_7 = arith.constant 1.000000e+00 : f32
    %19 = vector.broadcast %cst_7 : f32 to vector<8x1xf32>
    %20 = arith.mulf %19, %6 : vector<8x1xf32>
    %21 = tpu.reciprocal %20 {approx = true} : vector<8x1xf32> -> vector<8x1xf32>
    %cst_8 = arith.constant 1.41559529 : f32
    %22 = vector.broadcast %cst_8 : f32 to vector<8x1xf32>
    %23 = arith.mulf %18, %22 : vector<8x1xf32>
    %24 = arith.mulf %23, %21 : vector<8x1xf32>
    %c0_9 = arith.constant 0 : index
    %25 = memref.load %arg1[%c0_9] : memref<1xf32, #tpu.memory_space<smem>>
    %26 = vector.extract_strided_slice %0 {offsets = [0, 0], sizes = [8, 128], strides = [1, 1]} : vector<8x256xf32> to vector<8x128xf32>
    %27 = vector.broadcast %24 : vector<8x1xf32> to vector<8x128xf32>
    %28 = arith.mulf %26, %27 : vector<8x128xf32>
    %29 = vector.extract_strided_slice %0 {offsets = [0, 128], sizes = [8, 128], strides = [1, 1]} : vector<8x256xf32> to vector<8x128xf32>
    %30 = vector.broadcast %25 : f32 to vector<8x1xf32>
    %31 = arith.mulf %24, %30 : vector<8x1xf32>
    %32 = vector.broadcast %31 : vector<8x1xf32> to vector<8x128xf32>
    %33 = arith.mulf %29, %32 : vector<8x128xf32>
    %34 = arith.negf %33 : vector<8x128xf32>
    %35 = math.exp %34 : vector<8x128xf32>
    %cst_10 = arith.constant 1.000000e+00 : f32
    %36 = vector.broadcast %cst_10 : f32 to vector<8x128xf32>
    %37 = arith.addf %36, %35 : vector<8x128xf32>
    %38 = arith.divf %36, %37 : vector<8x128xf32>
    %39 = arith.mulf %28, %38 : vector<8x128xf32>
    %40 = arith.mulf %39, %39 : vector<8x128xf32>
    %cst_11 = arith.constant dense<0.000000e+00> : vector<8xf32>
    %41 = vector.multi_reduction <add>, %40, %cst_11 [1] : vector<8x128xf32> to vector<8xf32>
    %42 = vector.shape_cast %41 : vector<8xf32> to vector<8x1xf32>
    %43 = math.sqrt %42 : vector<8x1xf32>
    %cst_12 = arith.constant 1.000000e-15 : f32
    %44 = vector.broadcast %cst_12 : f32 to vector<8x1xf32>
    %45 = arith.maximumf %43, %44 : vector<8x1xf32>
    %cst_13 = arith.constant 1.000000e+00 : f32
    %46 = vector.broadcast %cst_13 : f32 to vector<8x1xf32>
    %47 = arith.mulf %46, %45 : vector<8x1xf32>
    %48 = math.tanh %47 : vector<8x1xf32>
    %cst_14 = arith.constant 1.000000e+00 : f32
    %49 = vector.broadcast %cst_14 : f32 to vector<8x1xf32>
    %50 = arith.mulf %48, %49 : vector<8x1xf32>
    %cst_15 = arith.constant 0.995999991 : f32
    %51 = vector.broadcast %cst_15 : f32 to vector<8x1xf32>
    %52 = arith.minimumf %50, %51 : vector<8x1xf32>
    %53 = tpu.reciprocal %45 {approx = true} : vector<8x1xf32> -> vector<8x1xf32>
    %54 = arith.mulf %52, %53 : vector<8x1xf32>
    %55 = vector.broadcast %54 : vector<8x1xf32> to vector<8x128xf32>
    %56 = arith.mulf %39, %55 : vector<8x128xf32>
    %c0_16 = arith.constant 0 : index
    %c0_17 = arith.constant 0 : index
    %57 = vector.load %arg3[%c0_16, %c0_17] : memref<8x128xf32, #tpu.memory_space<vmem>>, vector<8x128xf32>
    tpu.vector_store %arg3[%c0_16, %c0_17], %56 {strides = array<i32>} : memref<8x128xf32, #tpu.memory_space<vmem>>, vector<8x128xf32>,
    return
  }
  func.func @transform_0(%arg0: i32) -> i32 {
    %c0_i32 = arith.constant 0 : i32
    %c0_i32_0 = arith.constant 0 : i32
    return %c0_i32 : i32
  }
  func.func @transform_1(%arg0: i32) -> (i32, i32) {
    %c0_i32 = arith.constant 0 : i32
    %c0_i32_0 = arith.constant 0 : i32
    return %arg0, %c0_i32 : i32, i32
  }
  func.func @transform_2(%arg0: i32) -> (i32, i32) {
    %c0_i32 = arith.constant 0 : i32
    %c0_i32_0 = arith.constant 0 : i32
    return %arg0, %c0_i32 : i32, i32
  }
}

</mosaic_0001>

<llo_original>
// kernel: tpu_custom_call.1
$region0: #{tpu_custom_call.1}
  #allocation0 [shape = 'u32[]', space=smem, size = 0x4, offset = 0x4, fixed_abs, tag = 'smem constant byte address 0x4 - core index']
  #allocation1 [shape = 'u32[72,128]{1,0:T(1,128)}', space=vmem, size = 0x9000, scoped, tag = 'internal scratch']
  #allocation2 [shape = 'f32[1]{0:T(128)S(6)}', space=smem, size = 0x200, scoped, tag = 'scoped memory for tpu_custom_call.1']
  %s0 = inlined_call_operand.<no memory space> [shape: f32[1], index: 0, kind: input, shape index: {}]
  %s1 = inlined_call_operand.hbm [shape: f32[16,256], index: 1, kind: input, shape index: {}]
  %s2 = inlined_call_operand.hbm [shape: f32[16,128], index: 2, kind: output, shape index: {}]
  %s3 = sld [smem:[#allocation0]]
  $region45: #{tpu_custom_call.1} parent=0
    _
  %s5 = ssub.s32 1, %s3
  %s6 = scalar_select 0, %s5, %s3
  %7 = sst [smem:[#allocation2]] %s0
  $region1: #{tpu_custom_call.1} parent=0
    #allocation3 [shape = 'u8[16384]{0}', space=vmem, size = 0x4000, scoped, tag = 'input window, operand 1']
    #allocation4 [shape = 's32[2]{0}', space=sflag, size = 0x8, scoped, tag = 'scoped memory for tpu_custom_call.1']
    #allocation5 [shape = 's32[2]{0}', space=sflag, size = 0x8, scoped, tag = 'scoped memory for tpu_custom_call.1']
    #allocation6 [shape = 'u8[8192]{0}', space=vmem, size = 0x2000, scoped, tag = 'output window, operand 0']
    %8 = vsyncpa [#allocation4], 0
    %s9 = scalar_lea.sflag [#allocation4], 1
    %10 = vsyncpa %s9, 0
    %11 = vsyncpa [#allocation5], 0
    %s12 = scalar_lea.sflag [#allocation5], 1
    %13 = vsyncpa %s12, 0
    loop: start=0, step=1, limit=4
    $region2: #{tpu_custom_call.1} parent=1 // loop_pre_header
      _
    $region3: #{tpu_custom_call.1} parent=1 // loop_header
      %s15 = sphi 0, %s19
      %p16 = scmp.ge.s32.totalorder %s15, 4
      %s23 = sphi 0, %s23
      %s25 = sphi 0, %s23
      %s26 = sphi 0, %s25
      %s40 = sphi 0, %s26
      %s46 = sphi 0, %s48
      %s49 = sphi 0, %s46
      %s50 = sphi 0, %s49
      %s66 = sphi 0, %s50
      %s72 = sphi 0, %s74
      %s75 = sphi 0, %s72
      %s76 = sphi 0, %s75
      %s92 = sphi 0, %s76
    $region4: #{tpu_custom_call.1} parent=1 // loop_header_branch
      %18 = sbr.rel (%p16) target = $region8
    $region5: #{tpu_custom_call.1} parent=1 // loop_body
      %s20 = ssub.s32 %s15, 1
      %s21 = ssub.s32 %s15, 2
      %s22 = sadd.s32 %s15, 1
      %s24 = sadd.s32 %s23, 1
      %p27 = scmp.eq.s32.totalorder %s15, 1
      %p28 = scmp.ne.s32.totalorder %s23, %s25
      %p29 = scmp.eq.s32.totalorder %s15, 0
      %p30 = por %p28, %p29
      %p31 = scmp.ne.s32.totalorder %s23, %s25
      %p32 = scmp.eq.s32.totalorder %s20, 1
      %p33 = por %p31, %p32
      %p34 = scmp.ne.s32.totalorder %s25, %s26
      %p35 = scmp.eq.s32.totalorder %s20, 0
      %p36 = por %p34, %p35
      %p37 = scmp.ne.s32.totalorder %s25, %s26
      %p38 = scmp.eq.s32.totalorder %s21, 1
      %p39 = por %p37, %p38
      %p41 = scmp.ne.s32.totalorder %s26, %s40
      %p42 = scmp.eq.s32.totalorder %s21, 0
      %p43 = por %p41, %p42
      %s44 = ssub.s32 %s15, %s22
      %p45 = scmp.eq.s32.totalorder %s44, 0
      %s47 = sadd.s32 %s46, 1
      %s48 = scalar_select %p45, %s46, %s47
      %p51 = pneg %p45
      %p52 = scmp.eq.s32.totalorder %s15, 1
      %p53 = por %p51, %p52
      %p54 = scmp.ne.s32.totalorder %s46, %s49
      %p55 = scmp.eq.s32.totalorder %s15, 0
      %p56 = por %p54, %p55
      %p57 = scmp.ne.s32.totalorder %s46, %s49
      %p58 = scmp.eq.s32.totalorder %s20, 1
      %p59 = por %p57, %p58
      %p60 = scmp.ne.s32.totalorder %s49, %s50
      %p61 = scmp.eq.s32.totalorder %s20, 0
      %p62 = por %p60, %p61
      %p63 = scmp.ne.s32.totalorder %s49, %s50
      %p64 = scmp.eq.s32.totalorder %s21, 1
      %p65 = por %p63, %p64
      %p67 = scmp.ne.s32.totalorder %s50, %s66
      %p68 = scmp.eq.s32.totalorder %s21, 0
      %p69 = por %p67, %p68
      %s70 = ssub.s32 %s15, %s22
      %p71 = scmp.eq.s32.totalorder %s70, 0
      %s73 = sadd.s32 %s72, 1
      %s74 = scalar_select %p71, %s72, %s73
      %p77 = pneg %p71
      %p78 = scmp.eq.s32.totalorder %s15, 1
      %p79 = por %p77, %p78
      %p80 = scmp.ne.s32.totalorder %s72, %s75
      %p81 = scmp.eq.s32.totalorder %s15, 0
      %p82 = por %p80, %p81
      %p83 = scmp.ne.s32.totalorder %s72, %s75
      %p84 = scmp.eq.s32.totalorder %s20, 1
      %p85 = por %p83, %p84
      %p86 = scmp.ne.s32.totalorder %s75, %s76
      %p87 = scmp.eq.s32.totalorder %s20, 0
      %p88 = por %p86, %p87
      %p89 = scmp.ne.s32.totalorder %s75, %s76
      %p90 = scmp.eq.s32.totalorder %s21, 1
      %p91 = por %p89, %p90
      %p93 = scmp.ne.s32.totalorder %s76, %s92
      %p94 = scmp.eq.s32.totalorder %s21, 0
      %p95 = por %p93, %p94
      %p96 = scmp.le.s32.totalorder 1, %s15
      %p97 = scmp.lt.s32.totalorder %s15, 3
      %p98 = pnand %p96, %p97
      %p99 = pneg %p98
      // Predicated region
      $region9: #{tpu_custom_call.1} parent=5 // pred_check
        _
      $region10: #{tpu_custom_call.1} parent=5 // pred_check_branch
        %101 = sbr.rel (%p98) target = $region12
      $region11: #{tpu_custom_call.1} parent=5 // pred_region
        %s102 = ssub.s32 %s15, 1
        // Predicated region
        $region13: #{tpu_custom_call.1} parent=11 // pred_check
          %p103 = pneg %p36
        $region14: #{tpu_custom_call.1} parent=11 // pred_check_branch
          %105 = sbr.rel (%p103) target = $region16
        $region15: #{tpu_custom_call.1} parent=11 // pred_region
          _
        $region16: #{tpu_custom_call.1} parent=11 // pred_fallthru
          _
      $region12: #{tpu_custom_call.1} parent=5 // pred_fallthru
        _
      %p106 = scmp.lt.s32.totalorder %s15, 2
      // Predicated region
      $region17: #{tpu_custom_call.1} parent=5 // pred_check
        %p107 = pneg %p106
      $region18: #{tpu_custom_call.1} parent=5 // pred_check_branch
        %109 = sbr.rel (%p107) target = $region20
      $region19: #{tpu_custom_call.1} parent=5 // pred_region
        // Predicated region
        $region21: #{tpu_custom_call.1} parent=19 // pred_check
          %p110 = pneg %p56
        $region22: #{tpu_custom_call.1} parent=19 // pred_check_branch
          %112 = sbr.rel (%p110) target = $region24
        $region23: #{tpu_custom_call.1} parent=19 // pred_region
          %s113 = sand.u32 %s46, 1
          %s114 = scalar_lea.sflag [#allocation4], %s113
          %s115 = sand.u32 %s46, 1
          %s116 = smul.addr %s115, 16
          %s117 = scalar_lea.vmem [#allocation3], %s116
          %119 = vsyncadd %s114, 0
          %s120 = smul.addr %s15, 2
          %s121 = smul.addr %s120, 8
          %s122 = scalar_lea.hbm %s1, %s121
          %s124 = sshll.u32 %s122, 4
          %s125 = int_to_ptr.hbm [resolvable:$true] %s124
          %s126 = sshll.u32 %s117, 4
          %s127 = int_to_ptr.vmem [resolvable:$true] %s126
          %129 = dma.hbm_to_vmem [thread:$0]  %s125, 256, %s127, %s114
        $region24: #{tpu_custom_call.1} parent=19 // pred_fallthru
          _
      $region20: #{tpu_custom_call.1} parent=5 // pred_fallthru
        _
      %p130 = scmp.le.s32.totalorder 1, %s15
      %p131 = scmp.lt.s32.totalorder %s15, 3
      %p132 = pnand %p130, %p131
      %p133 = pneg %p132
      // Predicated region
      $region25: #{tpu_custom_call.1} parent=5 // pred_check
        _
      $region26: #{tpu_custom_call.1} parent=5 // pred_check_branch
        %135 = sbr.rel (%p132) target = $region28
      $region27: #{tpu_custom_call.1} parent=5 // pred_region
        %s136 = ssub.s32 %s15, 1
        %s137 = sand.u32 %s49, 1
        %s138 = scalar_lea.sflag [#allocation4], %s137
        %s139 = sand.u32 %s49, 1
        %s140 = smul.addr %s139, 16
        %s141 = scalar_lea.vmem [#allocation3], %s140
        // Predicated region
        $region29: #{tpu_custom_call.1} parent=27 // pred_check
          %p142 = pneg %p62
        $region30: #{tpu_custom_call.1} parent=27 // pred_check_branch
          %144 = sbr.rel (%p142) target = $region32
        $region31: #{tpu_custom_call.1} parent=27 // pred_region
          %146 = dma.done %s138, 256
        $region32: #{tpu_custom_call.1} parent=27 // pred_fallthru
          _
        %p147 = pneg %p36
        %p148 = pneg %p33
        %s149 = sand.u32 %s49, 1
        %s150 = scalar_lea.sflag [#allocation4], %s149
        %s151 = sand.u32 %s49, 1
        %s152 = smul.addr %s151, 16
        %s153 = scalar_lea.vmem [#allocation3], %s152
        %p154 = pneg %p62
        %p155 = pneg %p59
        %p156 = pneg %p88
        %p157 = pneg %p85
        %s158 = sand.u32 %s75, 1
        %s159 = scalar_lea.sflag [#allocation5], %s158
        %s160 = sand.u32 %s75, 1
        %s161 = smul.addr %s160, 8
        %s162 = scalar_lea.vmem [#allocation6], %s161
        %v163 = vld [vmem:[%s141] sm:$0xff]
        %v164 = vld [vmem:[%s141 + $0x8] sm:$0xff]
        %v165 = vmul.f32 %v163, %v163
        %v166 = vmul.f32 %v164, %v164
        %v167 = vadd.f32 %v165, %v166
        %168 = vadd.xlane.f32.xlu0 %v167
        %v169 = vpop.xlane.xlu0 %168
        %v170 = vrsqrt.pop %v169
        %v171 = vmul.f32 %v170, %v169
        %v172 = vmul.f32 %v171, %v170
        %v173 = vmul.f32 0.5, %v172
        %v174 = vsub.f32 1.5, %v173
        %v175 = vmul.f32 %v170, %v174
        %v176 = vmul.f32 %v169, %v175
        %vm177 = vcmp.eq.f32.partialorder %v169, inf
        %v178 = vsel %vm177, %v169, %v176
        %vm179 = vcmp.eq.f32.partialorder %v169, 0.0
        %v180 = vand.u32 %v169, 2147483648
        %v181 = vsel %vm179, %v180, %v178
        %v182 = vmax.f32 %v181, 1e-15
        %v183 = vmin.f32 %v182, 0.9999999
        %v184 = vadd.f32 %v183, 1.0
        %v185 = vsub.f32 1.0, %v183
        %v186 = vrcp.pop %v185
        %v187 = vmul.f32 %v185, %v186
        %v188 = vsub.f32 1.0, %v187
        %v189 = vmul.f32 %v186, %v188
        %v190 = vadd.f32 %v186, %v189
        %vm191 = vweird.f32 %v185
        %vm192 = vweird.f32 %v186
        %vm193 = vmor %vm191, %vm192
        %v194 = vsel %vm193, %v186, %v190
        %v195 = vand.u32 2147483647, %v185
        %vm196 = vcmp.eq.f32.partialorder %v195, 8.507059e+37
        %v197 = vand.u32 %v185, 2147483648
        %v198 = vor.u32 1.1754944e-38, %v197
        %v199 = vsel %vm196, %v198, %v194
        %v200 = vmul.f32 %v184, %v199
        %v201 = vlog2.pop %v200
        %v202 = vmul.f32 %v201, 0.6931472
        %v203 = vmul.f32 %v202, 0.5
        %v204 = vrcp.pop %v182
        %v205 = vmul.f32 %v203, 1.4155953
        %v206 = vmul.f32 %v205, %v204
        %s207 = sld [smem:[#allocation2]]
        %v208 = vmul.f32 %v163, %v206
        %v209 = vstv %s207
        %v210 = vmul.f32 %v206, %v209
        %v211 = vmul.f32 %v164, %v210
        %v212 = vxor.u32 %v211, 2147483648
        %v213 = vmul.f32 %v212, 1.442695
        %v214 = vpow.pop %v213
        %v215 = vadd.f32 %v214, 1.0
        %v216 = vrcp.pop %v215
        %v217 = vmul.f32 %v215, %v216
        %v218 = vsub.f32 1.0, %v217
        %v219 = vmul.f32 %v216, %v218
        %v220 = vadd.f32 %v216, %v219
        %vm221 = vweird.f32 %v215
        %vm222 = vweird.f32 %v216
        %vm223 = vmor %vm221, %vm222
        %v224 = vsel %vm223, %v216, %v220
        %v225 = vand.u32 2147483647, %v215
        %vm226 = vcmp.eq.f32.partialorder %v225, 8.507059e+37
        %v227 = vand.u32 %v215, 2147483648
        %v228 = vor.u32 1.1754944e-38, %v227
        %v229 = vsel %vm226, %v228, %v224
        %v230 = vmul.f32 1.0, %v229
        %v231 = vmul.f32 %v208, %v230
        %v232 = vmul.f32 %v231, %v231
        %233 = vadd.xlane.f32.xlu0 %v232
        %v234 = vpop.xlane.xlu0 %233
        %v235 = vrsqrt.pop %v234
        %v236 = vmul.f32 %v235, %v234
        %v237 = vmul.f32 %v236, %v235
        %v238 = vmul.f32 0.5, %v237
        %v239 = vsub.f32 1.5, %v238
        %v240 = vmul.f32 %v235, %v239
        %v241 = vmul.f32 %v234, %v240
        %vm242 = vcmp.eq.f32.partialorder %v234, inf
        %v243 = vsel %vm242, %v234, %v241
        %vm244 = vcmp.eq.f32.partialorder %v234, 0.0
        %v245 = vand.u32 %v234, 2147483648
        %v246 = vsel %vm244, %v245, %v243
        %v247 = vmax.f32 %v246, 1e-15
        %v248 = vtanh.pop %v247
        %v249 = vmin.f32 %v248, 0.996
        %v250 = vrcp.pop %v247
        %v251 = vmul.f32 %v249, %v250
        %v252 = vmul.f32 %v231, %v251
        %253 = vst [vmem:[%s162] sm:$0xff] %v252
        %s254 = sand.u32 %s75, 1
        %s255 = scalar_lea.sflag [#allocation5], %s254
        %s256 = sand.u32 %s75, 1
        %s257 = smul.addr %s256, 8
        %s258 = scalar_lea.vmem [#allocation6], %s257
        // Predicated region
        $region33: #{tpu_custom_call.1} parent=27 // pred_check
          %p259 = pneg %p85
        $region34: #{tpu_custom_call.1} parent=27 // pred_check_branch
          %261 = sbr.rel (%p259) target = $region36
        $region35: #{tpu_custom_call.1} parent=27 // pred_region
          %263 = vsyncadd %s255, 0
          %s264 = smul.addr %s20, 8
          %s265 = scalar_lea.hbm %s2, %s264
          %s267 = sshll.u32 %s258, 4
          %s268 = int_to_ptr.vmem [resolvable:$true] %s267
          %s269 = sshll.u32 %s265, 4
          %s270 = int_to_ptr.hbm [resolvable:$true] %s269
          %272 = dma.vmem_to_hbm [thread:$0]  %s268, 128, %s270, %s255
        $region36: #{tpu_custom_call.1} parent=27 // pred_fallthru
          _
      $region28: #{tpu_custom_call.1} parent=5 // pred_fallthru
        _
      %p273 = scmp.le.s32.totalorder 2, %s15
      // Predicated region
      $region37: #{tpu_custom_call.1} parent=5 // pred_check
        %p274 = pneg %p273
      $region38: #{tpu_custom_call.1} parent=5 // pred_check_branch
        %276 = sbr.rel (%p274) target = $region40
      $region39: #{tpu_custom_call.1} parent=5 // pred_region
        %s277 = ssub.s32 %s15, 2
        // Predicated region
        $region41: #{tpu_custom_call.1} parent=39 // pred_check
          %p278 = pneg %p91
        $region42: #{tpu_custom_call.1} parent=39 // pred_check_branch
          %280 = sbr.rel (%p278) target = $region44
        $region43: #{tpu_custom_call.1} parent=39 // pred_region
          %s281 = sand.u32 %s76, 1
          %s282 = scalar_lea.sflag [#allocation5], %s281
          %s283 = sand.u32 %s76, 1
          %s284 = smul.addr %s283, 8
          %s285 = scalar_lea.vmem [#allocation6], %s284
          %287 = dma.done %s282, 128
        $region44: #{tpu_custom_call.1} parent=39 // pred_fallthru
          _
      $region40: #{tpu_custom_call.1} parent=5 // pred_fallthru
        _
    $region6: #{tpu_custom_call.1} parent=1 // loop_footer
      %s19 = sadd.s32 1, %s15
    $region7: #{tpu_custom_call.1} parent=1 // loop_footer_branch
      %14 = sbr.rel target = $region3
    $region8: #{tpu_custom_call.1} parent=1 // loop_exit
      _
    %288 = vsyncpa [#allocation4], 1
    %s289 = scalar_lea.sflag [#allocation4], 1
    %290 = vsyncpa %s289, 1
    %291 = vsyncpa [#allocation5], 1
    %s292 = scalar_lea.sflag [#allocation5], 1
    %293 = vsyncpa %s292, 1

</llo_original>
